<compile_context>
chip_gen: v5e
topology: v5e:2x2
jax: 0.10.0
libtpu: 0.0.40
codegen_flags: <defaults>
</compile_context>

<pallas_src>
import functools

import jax
import jax.numpy as jnp
from jax.experimental import pallas as pl
from jax.experimental.pallas import tpu as pltpu

LANES = 128
SUBLANES = 8
ALIGN = SUBLANES * LANES  # 1024 elements per (8,128) row-block
# 8192 rows x 128 lanes x 4 B = 4 MiB per input per pipeline buffer.
MAX_TILE_ROWS = 8192


def _round_up(x, m):
    return ((x + m - 1) // m) * m


def _masked_sq_partial_kernel(x1_ref, x2_ref, out_ref, *, tile_rows,
                              valid_rows, need_row_mask):
    # Native-dtype loads; upcast in vregs (free on v6e/v7x bf16 VALU, cheaper
    # than an HBM round trip on v5e).
    x1 = x1_ref[...]
    x2 = x2_ref[...].astype(jnp.float32)
    # Fused mask math: contribution is (1 - x2) where x1 == 0, else 0.
    d = jnp.where(x1 == 0, 1.0 - x2, 0.0)
    sq = d * d

    def _reduce(v):
        # (tile_rows, 128) -> (8, 128) with plain vector adds; the reshape
        # respects (8, 128) tile boundaries so it lowers to a re-tiling.
        return jnp.sum(v.reshape(tile_rows // SUBLANES, SUBLANES, LANES),
                       axis=0)[None]

    if need_row_mask:  # static: only emitted when the last grid block is partial
        i = pl.program_id(0)
        is_last = i == pl.num_programs(0) - 1

        @pl.when(is_last)
        def _():
            # Mask applied AFTER the squaring so out-of-bounds edge data never
            # propagates (select does not propagate NaN/Inf).
            row = jax.lax.broadcasted_iota(jnp.int32, sq.shape, 0) + i * tile_rows
            out_ref[...] = _reduce(jnp.where(row < valid_rows, sq, 0.0))

        @pl.when(jnp.logical_not(is_last))
        def _():
            out_ref[...] = _reduce(sq)
    else:
        out_ref[...] = _reduce(sq)


def loss1_forward(x1, x2):
    """Masked MSE: mean over all elements of x1's shape of [x1==0]*(1-x2)^2."""
    assert x1.shape == x2.shape
    n = int(x1.size)
    x1f = x1.reshape(-1)  # native dtype; contiguous reshape is metadata-only
    x2f = x2.reshape(-1)

    # Kernel runs on the 1024-aligned prefix; the short tail is handled with
    # plain jnp in the wrapper (no full-array pad / copy through HBM).
    aligned_n = (n // ALIGN) * ALIGN
    rows = aligned_n // LANES  # multiple of 8

    if aligned_n < n:
        t1 = x1f[aligned_n:].astype(jnp.float32)
        t2 = x2f[aligned_n:].astype(jnp.float32)
        td = jnp.where(t1 == 0.0, 1.0 - t2, 0.0)
        tail_sum = jnp.sum(td * td)
    else:
        tail_sum = jnp.float32(0.0)

    if rows == 0:
        # Whole array fits in the tail path.
        return (tail_sum / jnp.float32(n)).astype(jnp.float32)

    tile_rows = min(MAX_TILE_ROWS, rows)  # multiple of 8
    if rows <= MAX_TILE_ROWS and rows > SUBLANES:
        # Ensure >=2 grid steps so v7x's second TensorCore gets work; on
        # single-TC chips the extra step costs ~0.35 us (negligible).
        tile_rows = _round_up(-(-rows // 2), SUBLANES)
    grid_len = pl.cdiv(rows, tile_rows)
    need_row_mask = (rows % tile_rows) != 0  # partial trailing block?

    x1m = x1f[:aligned_n].reshape(rows, LANES)
    x2m = x2f[:aligned_n].reshape(rows, LANES)

    kernel = functools.partial(
        _masked_sq_partial_kernel,
        tile_rows=tile_rows,
        valid_rows=rows,
        need_row_mask=need_row_mask,
    )

    in_bytes = aligned_n * (x1.dtype.itemsize + x2.dtype.itemsize)
    out_bytes = grid_len * SUBLANES * LANES * 4

    partials = pl.pallas_call(
        kernel,
        out_shape=jax.ShapeDtypeStruct((grid_len, SUBLANES, LANES), jnp.float32),
        grid_spec=pltpu.PrefetchScalarGridSpec(
            num_scalar_prefetch=0,
            grid=(grid_len,),
            in_specs=[
                pl.BlockSpec((tile_rows, LANES), lambda i: (i, 0)),
                pl.BlockSpec((tile_rows, LANES), lambda i: (i, 0)),
            ],
            out_specs=pl.BlockSpec((1, SUBLANES, LANES), lambda i: (i, 0, 0)),
        ),
        compiler_params=pltpu.CompilerParams(
            dimension_semantics=("parallel",),
            # 8192-row f32 tiles need ~16 MiB of double-buffered inputs;
            # raise above v5e's 16 MiB scoped default, stay well under v7x.
            vmem_limit_bytes=28 << 20,
        ),
        cost_estimate=pl.CostEstimate(
            flops=4 * aligned_n,
            transcendentals=0,
            bytes_accessed=in_bytes + out_bytes),
    )(x1m, x2m)

    # nn.MSELoss default reduction='mean' over the original element count.
    total = jnp.sum(partials) + tail_sum
    return (total / jnp.float32(n)).astype(jnp.float32)


def _reference(x1, x2):
    x1 = x1.astype(jnp.float32)
    x2 = x2.astype(jnp.float32)
    is_zero = x1 == 0.0
    xx1 = jnp.where(is_zero, 1.0, 0.0)
    xx2 = jnp.where(is_zero, x2, 0.0)
    return jnp.mean((xx1 - xx2) ** 2)


def _make_inputs(key, shape, dtype=jnp.float32):
    k1, k2, k3 = jax.random.split(key, 3)
    x1_dense = jax.random.normal(k1, shape, dtype=jnp.float32)
    zero_mask = jax.random.bernoulli(k3, 0.4, shape)
    x1 = jnp.where(zero_mask, 0.0, x1_dense)     # plenty of exact zeros
    x2 = jax.random.normal(k2, shape, dtype=jnp.float32)
    return x1.astype(dtype), x2.astype(dtype)


if __name__ == "__main__":
    key = jax.random.PRNGKey(0)

    # Primary small NCHW case (aligned size; 2 grid steps, no mask path).
    x1, x2 = _make_inputs(key, (2, 4, 16, 16))
    out = jax.block_until_ready(loss1_forward(x1, x2))
    ref = _reference(x1, x2)
    assert jnp.allclose(out, ref, rtol=1e-5, atol=1e-6), (out, ref)

    # Unaligned element count -> exercises the wrapper-side tail path.
    x1b, x2b = _make_inputs(jax.random.PRNGKey(1), (2, 3, 15, 15))
    outb = jax.block_until_ready(loss1_forward(x1b, x2b))
    refb = _reference(x1b, x2b)
    assert jnp.allclose(outb, refb, rtol=1e-5, atol=1e-6), (outb, refb)

    # Rows not divisible by tile_rows -> exercises the pl.when-gated row mask
    # on the partial trailing grid block.
    x1c, x2c = _make_inputs(jax.random.PRNGKey(2), (3, 4, 16, 16))
    outc = jax.block_until_ready(loss1_forward(x1c, x2c))
    refc = _reference(x1c, x2c)
    assert jnp.allclose(outc, refc, rtol=1e-5, atol=1e-6), (outc, refc)

    # Native bf16 ingestion (upcast happens inside the kernel, not in HBM).
    x1d, x2d = _make_inputs(jax.random.PRNGKey(3), (2, 4, 16, 16),
                            dtype=jnp.bfloat16)
    outd = jax.block_until_ready(loss1_forward(x1d, x2d))
    refd = _reference(x1d, x2d)
    assert jnp.allclose(outd, refd, rtol=1e-5, atol=1e-6), (outd, refd)

    print("KERNEL_OK")
</pallas_src>

<mosaic_0001>
module attributes {stable_mosaic.version = 11 : i64} {
  func.func @_masked_sq_partial_kernel(%arg0: i32, %arg1: memref<8x128xf32, #tpu.memory_space<vmem>>, %arg2: memref<8x128xf32, #tpu.memory_space<vmem>>, %arg3: memref<1x8x128xf32, #tpu.memory_space<vmem>>) attributes {dimension_semantics = [#tpu.dimension_semantics<parallel>], iteration_bounds = array<i64: 2>, scalar_prefetch = 0 : i64, scratch_operands = 0 : i64, tpu.core_type = #tpu.core_type<tc>, window_params = [{transform_indices = @transform_0, window_bounds = array<i64: 8, 128>}, {transform_indices = @transform_1, window_bounds = array<i64: 8, 128>}, {transform_indices = @transform_2, window_bounds = array<i64: 1, 8, 128>}]} {
    %c0 = arith.constant 0 : index
    %c0_0 = arith.constant 0 : index
    %0 = vector.load %arg1[%c0, %c0_0] : memref<8x128xf32, #tpu.memory_space<vmem>>, vector<8x128xf32>
    %c0_1 = arith.constant 0 : index
    %c0_2 = arith.constant 0 : index
    %1 = vector.load %arg2[%c0_1, %c0_2] : memref<8x128xf32, #tpu.memory_space<vmem>>, vector<8x128xf32>
    %cst = arith.constant 0.000000e+00 : f32
    %2 = vector.broadcast %cst : f32 to vector<8x128xf32>
    %3 = arith.cmpf oeq, %0, %2 : vector<8x128xf32>
    %cst_3 = arith.constant 1.000000e+00 : f32
    %4 = vector.broadcast %cst_3 : f32 to vector<8x128xf32>
    %5 = arith.subf %4, %1 : vector<8x128xf32>
    %cst_4 = arith.constant 0.000000e+00 : f32
    %6 = vector.broadcast %cst_4 : f32 to vector<8x128xf32>
    %7 = arith.select %3, %5, %6 : vector<8x128xi1>, vector<8x128xf32>
    %8 = arith.mulf %7, %7 : vector<8x128xf32>
    %9 = vector.shape_cast %8 : vector<8x128xf32> to vector<1x8x128xf32>
    %cst_5 = arith.constant dense<0.000000e+00> : vector<8x128xf32>
    %10 = vector.multi_reduction <add>, %9, %cst_5 [0] : vector<1x8x128xf32> to vector<8x128xf32>
    %11 = vector.shape_cast %10 : vector<8x128xf32> to vector<1x8x128xf32>
    %c0_6 = arith.constant 0 : index
    %c0_7 = arith.constant 0 : index
    %c0_8 = arith.constant 0 : index
    %12 = vector.load %arg3[%c0_6, %c0_7, %c0_8] : memref<1x8x128xf32, #tpu.memory_space<vmem>>, vector<1x8x128xf32>
    tpu.vector_store %arg3[%c0_6, %c0_7, %c0_8], %11 {strides = array<i32>} : memref<1x8x128xf32, #tpu.memory_space<vmem>>, vector<1x8x128xf32>,
    return
  }
  func.func @transform_0(%arg0: i32) -> (i32, i32) {
    %c0_i32 = arith.constant 0 : i32
    %c0_i32_0 = arith.constant 0 : i32
    return %arg0, %c0_i32 : i32, i32
  }
  func.func @transform_1(%arg0: i32) -> (i32, i32) {
    %c0_i32 = arith.constant 0 : i32
    %c0_i32_0 = arith.constant 0 : i32
    return %arg0, %c0_i32 : i32, i32
  }
  func.func @transform_2(%arg0: i32) -> (i32, i32, i32) {
    %c0_i32 = arith.constant 0 : i32
    %c0_i32_0 = arith.constant 0 : i32
    %c0_i32_1 = arith.constant 0 : i32
    return %arg0, %c0_i32, %c0_i32_0 : i32, i32, i32
  }
}

</mosaic_0001>

<llo_original>
// kernel: tpu_custom_call.1
$region0: #{tpu_custom_call.1}
  #allocation0 [shape = 'u32[]', space=smem, size = 0x4, offset = 0x4, fixed_abs, tag = 'smem constant byte address 0x4 - core index']
  #allocation1 [shape = 'u32[72,128]{1,0:T(1,128)}', space=vmem, size = 0x9000, scoped, tag = 'internal scratch']
  %s0 = inlined_call_operand.hbm [shape: f32[16,128], index: 0, kind: input, shape index: {}]
  %s1 = inlined_call_operand.hbm [shape: f32[16,128], index: 1, kind: input, shape index: {}]
  %s2 = inlined_call_operand.hbm [shape: f32[2,8,128], index: 2, kind: output, shape index: {}]
  %s3 = sld [smem:[#allocation0]]
  $region49: #{tpu_custom_call.1} parent=0
    _
  %s5 = ssub.s32 1, %s3
  %s6 = scalar_select 0, %s5, %s3
  $region1: #{tpu_custom_call.1} parent=0
    #allocation2 [shape = 'u8[8192]{0}', space=vmem, size = 0x2000, scoped, tag = 'input window, operand 0']
    #allocation3 [shape = 's32[2]{0}', space=sflag, size = 0x8, scoped, tag = 'scoped memory for tpu_custom_call.1']
    #allocation4 [shape = 's32[2]{0}', space=sflag, size = 0x8, scoped, tag = 'scoped memory for tpu_custom_call.1']
    #allocation5 [shape = 'u8[8192]{0}', space=vmem, size = 0x2000, scoped, tag = 'input window, operand 1']
    #allocation6 [shape = 's32[2]{0}', space=sflag, size = 0x8, scoped, tag = 'scoped memory for tpu_custom_call.1']
    #allocation7 [shape = 'u8[8192]{0}', space=vmem, size = 0x2000, scoped, tag = 'output window, operand 0']
    %7 = vsyncpa [#allocation3], 0
    %s8 = scalar_lea.sflag [#allocation3], 1
    %9 = vsyncpa %s8, 0
    %10 = vsyncpa [#allocation6], 0
    %s11 = scalar_lea.sflag [#allocation6], 1
    %12 = vsyncpa %s11, 0
    %13 = vsyncpa [#allocation4], 0
    %s14 = scalar_lea.sflag [#allocation4], 1
    %15 = vsyncpa %s14, 0
    loop: start=0, step=1, limit=4
    $region2: #{tpu_custom_call.1} parent=1 // loop_pre_header
      _
    $region3: #{tpu_custom_call.1} parent=1 // loop_header
      %s17 = sphi 0, %s21
      %p18 = scmp.ge.s32.totalorder %s17, 4
      %s27 = sphi 0, %s29
      %s30 = sphi 0, %s27
      %s31 = sphi 0, %s30
      %s47 = sphi 0, %s31
      %s53 = sphi 0, %s55
      %s56 = sphi 0, %s53
      %s57 = sphi 0, %s56
      %s73 = sphi 0, %s57
      %s79 = sphi 0, %s81
      %s82 = sphi 0, %s79
      %s83 = sphi 0, %s82
      %s99 = sphi 0, %s83
    $region4: #{tpu_custom_call.1} parent=1 // loop_header_branch
      %20 = sbr.rel (%p18) target = $region8
    $region5: #{tpu_custom_call.1} parent=1 // loop_body
      %s22 = ssub.s32 %s17, 1
      %s23 = ssub.s32 %s17, 2
      %s24 = sadd.s32 %s17, 1
      %s25 = ssub.s32 %s17, %s24
      %p26 = scmp.eq.s32.totalorder %s25, 0
      %s28 = sadd.s32 %s27, 1
      %s29 = scalar_select %p26, %s27, %s28
      %p32 = pneg %p26
      %p33 = scmp.eq.s32.totalorder %s17, 1
      %p34 = por %p32, %p33
      %p35 = scmp.ne.s32.totalorder %s27, %s30
      %p36 = scmp.eq.s32.totalorder %s17, 0
      %p37 = por %p35, %p36
      %p38 = scmp.ne.s32.totalorder %s27, %s30
      %p39 = scmp.eq.s32.totalorder %s22, 1
      %p40 = por %p38, %p39
      %p41 = scmp.ne.s32.totalorder %s30, %s31
      %p42 = scmp.eq.s32.totalorder %s22, 0
      %p43 = por %p41, %p42
      %p44 = scmp.ne.s32.totalorder %s30, %s31
      %p45 = scmp.eq.s32.totalorder %s23, 1
      %p46 = por %p44, %p45
      %p48 = scmp.ne.s32.totalorder %s31, %s47
      %p49 = scmp.eq.s32.totalorder %s23, 0
      %p50 = por %p48, %p49
      %s51 = ssub.s32 %s17, %s24
      %p52 = scmp.eq.s32.totalorder %s51, 0
      %s54 = sadd.s32 %s53, 1
      %s55 = scalar_select %p52, %s53, %s54
      %p58 = pneg %p52
      %p59 = scmp.eq.s32.totalorder %s17, 1
      %p60 = por %p58, %p59
      %p61 = scmp.ne.s32.totalorder %s53, %s56
      %p62 = scmp.eq.s32.totalorder %s17, 0
      %p63 = por %p61, %p62
      %p64 = scmp.ne.s32.totalorder %s53, %s56
      %p65 = scmp.eq.s32.totalorder %s22, 1
      %p66 = por %p64, %p65
      %p67 = scmp.ne.s32.totalorder %s56, %s57
      %p68 = scmp.eq.s32.totalorder %s22, 0
      %p69 = por %p67, %p68
      %p70 = scmp.ne.s32.totalorder %s56, %s57
      %p71 = scmp.eq.s32.totalorder %s23, 1
      %p72 = por %p70, %p71
      %p74 = scmp.ne.s32.totalorder %s57, %s73
      %p75 = scmp.eq.s32.totalorder %s23, 0
      %p76 = por %p74, %p75
      %s77 = ssub.s32 %s17, %s24
      %p78 = scmp.eq.s32.totalorder %s77, 0
      %s80 = sadd.s32 %s79, 1
      %s81 = scalar_select %p78, %s79, %s80
      %p84 = pneg %p78
      %p85 = scmp.eq.s32.totalorder %s17, 1
      %p86 = por %p84, %p85
      %p87 = scmp.ne.s32.totalorder %s79, %s82
      %p88 = scmp.eq.s32.totalorder %s17, 0
      %p89 = por %p87, %p88
      %p90 = scmp.ne.s32.totalorder %s79, %s82
      %p91 = scmp.eq.s32.totalorder %s22, 1
      %p92 = por %p90, %p91
      %p93 = scmp.ne.s32.totalorder %s82, %s83
      %p94 = scmp.eq.s32.totalorder %s22, 0
      %p95 = por %p93, %p94
      %p96 = scmp.ne.s32.totalorder %s82, %s83
      %p97 = scmp.eq.s32.totalorder %s23, 1
      %p98 = por %p96, %p97
      %p100 = scmp.ne.s32.totalorder %s83, %s99
      %p101 = scmp.eq.s32.totalorder %s23, 0
      %p102 = por %p100, %p101
      %p103 = scmp.le.s32.totalorder 1, %s17
      %p104 = scmp.lt.s32.totalorder %s17, 3
      %p105 = pnand %p103, %p104
      %p106 = pneg %p105
      // Predicated region
      $region9: #{tpu_custom_call.1} parent=5 // pred_check
        _
      $region10: #{tpu_custom_call.1} parent=5 // pred_check_branch
        %108 = sbr.rel (%p105) target = $region12
      $region11: #{tpu_custom_call.1} parent=5 // pred_region
        %s109 = ssub.s32 %s17, 1
      $region12: #{tpu_custom_call.1} parent=5 // pred_fallthru
        _
      %p110 = scmp.lt.s32.totalorder %s17, 2
      // Predicated region
      $region13: #{tpu_custom_call.1} parent=5 // pred_check
        %p111 = pneg %p110
      $region14: #{tpu_custom_call.1} parent=5 // pred_check_branch
        %113 = sbr.rel (%p111) target = $region16
      $region15: #{tpu_custom_call.1} parent=5 // pred_region
        // Predicated region
        $region17: #{tpu_custom_call.1} parent=15 // pred_check
          %p114 = pneg %p37
        $region18: #{tpu_custom_call.1} parent=15 // pred_check_branch
          %116 = sbr.rel (%p114) target = $region20
        $region19: #{tpu_custom_call.1} parent=15 // pred_region
          %s117 = sand.u32 %s27, 1
          %s118 = scalar_lea.sflag [#allocation3], %s117
          %s119 = sand.u32 %s27, 1
          %s120 = smul.addr %s119, 8
          %s121 = scalar_lea.vmem [#allocation2], %s120
          %123 = vsyncadd %s118, 0
          %s124 = smul.addr %s17, 8
          %s125 = scalar_lea.hbm %s0, %s124
          %s127 = sshll.u32 %s125, 4
          %s128 = int_to_ptr.hbm [resolvable:$true] %s127
          %s129 = sshll.u32 %s121, 4
          %s130 = int_to_ptr.vmem [resolvable:$true] %s129
          %132 = dma.hbm_to_vmem [thread:$0]  %s128, 128, %s130, %s118
        $region20: #{tpu_custom_call.1} parent=15 // pred_fallthru
          _
        // Predicated region
        $region21: #{tpu_custom_call.1} parent=15 // pred_check
          %p133 = pneg %p63
        $region22: #{tpu_custom_call.1} parent=15 // pred_check_branch
          %135 = sbr.rel (%p133) target = $region24
        $region23: #{tpu_custom_call.1} parent=15 // pred_region
          %s136 = sand.u32 %s53, 1
          %s137 = scalar_lea.sflag [#allocation6], %s136
          %s138 = sand.u32 %s53, 1
          %s139 = smul.addr %s138, 8
          %s140 = scalar_lea.vmem [#allocation5], %s139
          %142 = vsyncadd %s137, 0
          %s143 = smul.addr %s17, 8
          %s144 = scalar_lea.hbm %s1, %s143
          %s146 = sshll.u32 %s144, 4
          %s147 = int_to_ptr.hbm [resolvable:$true] %s146
          %s148 = sshll.u32 %s140, 4
          %s149 = int_to_ptr.vmem [resolvable:$true] %s148
          %151 = dma.hbm_to_vmem [thread:$0]  %s147, 128, %s149, %s137
        $region24: #{tpu_custom_call.1} parent=15 // pred_fallthru
          _
      $region16: #{tpu_custom_call.1} parent=5 // pred_fallthru
        _
      %p152 = scmp.le.s32.totalorder 1, %s17
      %p153 = scmp.lt.s32.totalorder %s17, 3
      %p154 = pnand %p152, %p153
      %p155 = pneg %p154
      // Predicated region
      $region25: #{tpu_custom_call.1} parent=5 // pred_check
        _
      $region26: #{tpu_custom_call.1} parent=5 // pred_check_branch
        %157 = sbr.rel (%p154) target = $region28
      $region27: #{tpu_custom_call.1} parent=5 // pred_region
        %s158 = ssub.s32 %s17, 1
        %s159 = sand.u32 %s30, 1
        %s160 = scalar_lea.sflag [#allocation3], %s159
        %s161 = sand.u32 %s30, 1
        %s162 = smul.addr %s161, 8
        %s163 = scalar_lea.vmem [#allocation2], %s162
        // Predicated region
        $region29: #{tpu_custom_call.1} parent=27 // pred_check
          %p164 = pneg %p43
        $region30: #{tpu_custom_call.1} parent=27 // pred_check_branch
          %166 = sbr.rel (%p164) target = $region32
        $region31: #{tpu_custom_call.1} parent=27 // pred_region
          %168 = dma.done %s160, 128
        $region32: #{tpu_custom_call.1} parent=27 // pred_fallthru
          _
        %s169 = sand.u32 %s56, 1
        %s170 = scalar_lea.sflag [#allocation6], %s169
        %s171 = sand.u32 %s56, 1
        %s172 = smul.addr %s171, 8
        %s173 = scalar_lea.vmem [#allocation5], %s172
        // Predicated region
        $region33: #{tpu_custom_call.1} parent=27 // pred_check
          %p174 = pneg %p69
        $region34: #{tpu_custom_call.1} parent=27 // pred_check_branch
          %176 = sbr.rel (%p174) target = $region36
        $region35: #{tpu_custom_call.1} parent=27 // pred_region
          %178 = dma.done %s170, 128
        $region36: #{tpu_custom_call.1} parent=27 // pred_fallthru
          _
        %s179 = sand.u32 %s30, 1
        %s180 = scalar_lea.sflag [#allocation3], %s179
        %s181 = sand.u32 %s30, 1
        %s182 = smul.addr %s181, 8
        %s183 = scalar_lea.vmem [#allocation2], %s182
        %p184 = pneg %p43
        %p185 = pneg %p40
        %s186 = sand.u32 %s56, 1
        %s187 = scalar_lea.sflag [#allocation6], %s186
        %s188 = sand.u32 %s56, 1
        %s189 = smul.addr %s188, 8
        %s190 = scalar_lea.vmem [#allocation5], %s189
        %p191 = pneg %p69
        %p192 = pneg %p66
        %p193 = pneg %p95
        %p194 = pneg %p92
        %s195 = sand.u32 %s82, 1
        %s196 = scalar_lea.sflag [#allocation4], %s195
        %s197 = sand.u32 %s82, 1
        %s198 = smul.addr %s197, 8
        %s199 = scalar_lea.vmem [#allocation7], %s198
        %v200 = vld [vmem:[%s163] sm:$0xff]
        %v201 = vld [vmem:[%s173] sm:$0xff]
        %vm202 = vcmp.eq.f32.partialorder %v200, 0.0
        %v203 = vsub.f32 1.0, %v201
        %v204 = vsel %vm202, %v203, 0.0
        %v205 = vmul.f32 %v204, %v204
        %v206 = vadd.f32 %v205, 0.0
        %207 = vst [vmem:[%s199] sm:$0xff] %v206
        %s208 = sand.u32 %s82, 1
        %s209 = scalar_lea.sflag [#allocation4], %s208
        %s210 = sand.u32 %s82, 1
        %s211 = smul.addr %s210, 8
        %s212 = scalar_lea.vmem [#allocation7], %s211
        // Predicated region
        $region37: #{tpu_custom_call.1} parent=27 // pred_check
          %p213 = pneg %p92
        $region38: #{tpu_custom_call.1} parent=27 // pred_check_branch
          %215 = sbr.rel (%p213) target = $region40
        $region39: #{tpu_custom_call.1} parent=27 // pred_region
          %217 = vsyncadd %s209, 0
          %s218 = smul.addr %s22, 8
          %s219 = scalar_lea.hbm %s2, %s218
          %s221 = sshll.u32 %s212, 4
          %s222 = int_to_ptr.vmem [resolvable:$true] %s221
          %s223 = sshll.u32 %s219, 4
          %s224 = int_to_ptr.hbm [resolvable:$true] %s223
          %226 = dma.vmem_to_hbm [thread:$0]  %s222, 128, %s224, %s209
        $region40: #{tpu_custom_call.1} parent=27 // pred_fallthru
          _
      $region28: #{tpu_custom_call.1} parent=5 // pred_fallthru
        _
      %p227 = scmp.le.s32.totalorder 2, %s17
      // Predicated region
      $region41: #{tpu_custom_call.1} parent=5 // pred_check
        %p228 = pneg %p227
      $region42: #{tpu_custom_call.1} parent=5 // pred_check_branch
        %230 = sbr.rel (%p228) target = $region44
      $region43: #{tpu_custom_call.1} parent=5 // pred_region
        %s231 = ssub.s32 %s17, 2
        // Predicated region
        $region45: #{tpu_custom_call.1} parent=43 // pred_check
          %p232 = pneg %p98
        $region46: #{tpu_custom_call.1} parent=43 // pred_check_branch
          %234 = sbr.rel (%p232) target = $region48
        $region47: #{tpu_custom_call.1} parent=43 // pred_region
          %s235 = sand.u32 %s83, 1
          %s236 = scalar_lea.sflag [#allocation4], %s235
          %s237 = sand.u32 %s83, 1
          %s238 = smul.addr %s237, 8
          %s239 = scalar_lea.vmem [#allocation7], %s238
          %241 = dma.done %s236, 128
        $region48: #{tpu_custom_call.1} parent=43 // pred_fallthru
          _
      $region44: #{tpu_custom_call.1} parent=5 // pred_fallthru
        _
    $region6: #{tpu_custom_call.1} parent=1 // loop_footer
      %s21 = sadd.s32 1, %s17
    $region7: #{tpu_custom_call.1} parent=1 // loop_footer_branch
      %16 = sbr.rel target = $region3
    $region8: #{tpu_custom_call.1} parent=1 // loop_exit
      _
    %242 = vsyncpa [#allocation3], 1
    %s243 = scalar_lea.sflag [#allocation3], 1
    %244 = vsyncpa %s243, 1
    %245 = vsyncpa [#allocation6], 1
    %s246 = scalar_lea.sflag [#allocation6], 1
    %247 = vsyncpa %s246, 1
    %248 = vsyncpa [#allocation4], 1
    %s249 = scalar_lea.sflag [#allocation4], 1
    %250 = vsyncpa %s249, 1

</llo_original>
